<compile_context>
chip_gen: v6e
topology: v6e:2x2x1
jax: 0.10.0
libtpu: 0.0.40
codegen_flags: <defaults>
</compile_context>

<pallas_src>
import functools
import math

import jax
import jax.numpy as jnp
from jax.experimental import pallas as pl
from jax.experimental.pallas import tpu as pltpu

_LANE = 128
_CHUNK_TARGET_BYTES = 32 * 1024            # in-kernel compute chunk size
_VMEM_LIMIT_BYTES = 48 * 1024 * 1024


def _target_block_bytes():
    """Generation-aware DMA block size.

    v7x (3.2 TB/s HBM, 64 MiB VMEM/TC) needs bigger blocks than v5e/v6e to hide
    the fixed ~0.35us per-grid-step overhead; the double-buffered in+out
    footprint is 4x the block, kept <= 32 MiB on every generation.
    """
    try:
        kind = jax.devices()[0].device_kind.lower()
    except Exception:  # pragma: no cover - backend query failure
        kind = ""
    return (8 if "v7" in kind else 4) * 1024 * 1024


def _group_sort_kernel(x_ref, o_ref, *, group_size, lane_width, chunk_rows,
                       num_chunks):
    """Sort ascending within every contiguous `group_size`-lane chunk of a row.

    x_ref / o_ref: (tile_rows, lane_width) blocks, tile_rows == num_chunks *
    chunk_rows (or the full row count for small inputs).  Compute is strip-mined
    over `chunk_rows`-row slices so the odd-even transposition network stays in
    a bounded number of vregs regardless of the DMA block size.
    """
    shape = (chunk_rows, lane_width)

    # Per-lane position within its group, computed in-kernel (no extra DMA).
    lane = jax.lax.broadcasted_iota(jnp.int32, (1, lane_width), 1)
    if (group_size & (group_size - 1)) == 0:
        gpos = jnp.bitwise_and(lane, group_size - 1)
    else:
        gpos = lane % group_size
    parity = jnp.bitwise_and(gpos, 1)
    even_full = (group_size % 2) == 0       # even pass partitions every lane

    # Hoisted mask broadcasts (JAX does not CSE broadcast_in_dim).
    even_lo = jnp.broadcast_to((parity == 0) & (gpos < group_size - 1), shape)
    even_hi = jnp.broadcast_to(parity == 1, shape)
    if group_size > 2:
        odd_lo = jnp.broadcast_to((parity == 1) & (gpos < group_size - 1), shape)
        odd_hi = jnp.broadcast_to((parity == 0) & (gpos >= 1), shape)

    def compare_exchange(v, m_lo, m_hi, full):
        # pltpu.roll follows jnp.roll: roll(v, s)[l] == v[(l - s) % L].
        nxt = pltpu.roll(v, lane_width - 1, axis=1)   # value of lane l+1 at lane l
        prv = pltpu.roll(v, 1, axis=1)                # value of lane l-1 at lane l
        lo = jnp.minimum(v, nxt)
        hi = jnp.maximum(v, prv)
        # Lanes touched by roll wrap-around are never selected by the masks.
        if full:
            return jnp.where(m_lo, lo, hi)
        return jnp.where(m_lo, lo, jnp.where(m_hi, hi, v))

    def sort_chunk(v):
        if group_size == 2:                 # MaxMin fast path: one pass.
            return compare_exchange(v, even_lo, even_hi, True)
        if group_size <= 32:                # fully unrolled: exactly G passes.
            for p in range(group_size):
                if p % 2 == 0:
                    v = compare_exchange(v, even_lo, even_hi, even_full)
                else:
                    v = compare_exchange(v, odd_lo, odd_hi, False)
            return v

        # 2*ceil(G/2) passes == G (+1 extra, harmless, pass when G is odd).
        def pair_of_passes(_, w):
            w = compare_exchange(w, even_lo, even_hi, even_full)
            w = compare_exchange(w, odd_lo, odd_hi, False)
            return w
        return jax.lax.fori_loop(0, (group_size + 1) // 2, pair_of_passes, v,
                                 unroll=2)

    if num_chunks == 1:
        o_ref[...] = sort_chunk(x_ref[...])
        return

    def body(c, carry):
        r0 = pl.multiple_of(c * chunk_rows, chunk_rows)
        v = x_ref[pl.ds(r0, chunk_rows), :]
        o_ref[pl.ds(r0, chunk_rows), :] = sort_chunk(v)
        return carry

    jax.lax.fori_loop(0, num_chunks, body, 0)


def group_sort_pallas(x, num_units, axis=-1):
    """GroupSort forward pass using a Pallas TPU kernel."""
    c = x.shape[axis]
    if c % num_units:
        raise ValueError(
            "number of features({}) is not a multiple of num_units({})".format(
                c, num_units))
    group_size = c // num_units
    if group_size == 1 or x.size == 0:
        return x

    # axis == -1 is the zero-copy fast path (pure reshapes); other axes pay an
    # XLA transpose on each side of the kernel.
    needs_move = axis not in (-1, x.ndim - 1)
    xm = jnp.moveaxis(x, axis, -1) if needs_move else x

    flat = xm.reshape(-1)
    total = flat.shape[0]

    # Row width: lcm(group_size, 128) lanes, so rows are lane-dense and a group
    # never straddles a row (single-vreg rolls when group_size | 128).
    lane_width = group_size * (_LANE // math.gcd(group_size, _LANE))

    pad = (-total) % lane_width              # whole dummy groups only
    if pad:
        flat = jnp.pad(flat, (0, pad))
    rows = (total + pad) // lane_width
    x2d = flat.reshape(rows, lane_width)

    itemsize = x2d.dtype.itemsize
    bytes_per_row = lane_width * itemsize
    sub = max(8, 32 // itemsize)             # packed sublane multiple per dtype

    # In-kernel compute chunk: small enough to keep the sort passes in vregs.
    chunk_rows = max(sub, (_CHUNK_TARGET_BYTES // bytes_per_row) // sub * sub)

    if rows <= chunk_rows:
        tile_rows = rows
        chunk_rows = rows
        num_chunks = 1
    else:
        budget_rows = max(
            chunk_rows,
            (_target_block_bytes() // bytes_per_row) // chunk_rows * chunk_rows)
        # Guarantee >= 2 grid steps so v7x's two TensorCores both get work.
        half_rows = (rows + 1) // 2
        half_rows = ((half_rows + chunk_rows - 1) // chunk_rows) * chunk_rows
        tile_rows = min(budget_rows, half_rows)
        num_chunks = tile_rows // chunk_rows

    passes = 1 if group_size == 2 else group_size
    kernel = functools.partial(
        _group_sort_kernel, group_size=group_size, lane_width=lane_width,
        chunk_rows=chunk_rows, num_chunks=num_chunks)

    y2d = pl.pallas_call(
        kernel,
        out_shape=jax.ShapeDtypeStruct((rows, lane_width), x2d.dtype),
        grid=(pl.cdiv(rows, tile_rows),),
        in_specs=[pl.BlockSpec((tile_rows, lane_width), lambda i: (i, 0))],
        out_specs=pl.BlockSpec((tile_rows, lane_width), lambda i: (i, 0)),
        compiler_params=pltpu.CompilerParams(
            dimension_semantics=("parallel",),
            vmem_limit_bytes=_VMEM_LIMIT_BYTES,
        ),
        cost_estimate=pl.CostEstimate(
            flops=4 * passes * rows * lane_width,
            transcendentals=0,
            bytes_accessed=2 * rows * lane_width * itemsize,
        ),
    )(x2d)

    out = y2d.reshape(-1)
    if pad:
        out = out[:total]
    out = out.reshape(xm.shape)
    return jnp.moveaxis(out, -1, axis) if needs_move else out


def _check_group_sorted(y, num_units, axis=-1):
    """Host-side analogue of check_group_sorted (non-decreasing within groups)."""
    c = y.shape[axis]
    group_size = c // num_units
    ym = jnp.moveaxis(y, axis, -1).reshape(-1, num_units, group_size)
    return int(jnp.sum(jnp.diff(ym, axis=-1) < 0) == 0)


if __name__ == "__main__":
    key = jax.random.PRNGKey(0)

    # Shapes consistent with the module: batch=2, seq=8, hidden=32.
    batch, seq, hidden = 2, 8, 32
    x = jax.random.normal(key, (batch, seq, hidden), dtype=jnp.float32)

    # Case 1: num_units=8 -> group_size=4 along the last axis.
    num_units = 8
    y = jax.block_until_ready(group_sort_pallas(x, num_units, axis=-1))
    ref = jnp.sort(x.reshape(batch, seq, num_units, hidden // num_units),
                   axis=-1).reshape(batch, seq, hidden)
    assert y.shape == x.shape and y.dtype == x.dtype
    assert jnp.allclose(y, ref), "GroupSort (group_size=4) mismatch vs reference"
    assert _check_group_sorted(y, num_units, axis=-1) == 1, "GroupSort failed."

    # Case 2: MaxMin (group_size == 2) single-pass fast path.
    y2 = jax.block_until_ready(group_sort_pallas(x, hidden // 2, axis=-1))
    ref2 = jnp.sort(x.reshape(batch, seq, hidden // 2, 2),
                    axis=-1).reshape(batch, seq, hidden)
    assert jnp.allclose(y2, ref2), "GroupSort (group_size=2) mismatch vs reference"

    # Case 3: total size not a multiple of the 128-lane row width (padding path).
    x3 = jax.random.normal(jax.random.PRNGKey(1), (3, 5, 8), dtype=jnp.float32)
    y3 = jax.block_until_ready(group_sort_pallas(x3, 2, axis=-1))
    ref3 = jnp.sort(x3.reshape(3, 5, 2, 4), axis=-1).reshape(3, 5, 8)
    assert jnp.allclose(y3, ref3), "GroupSort padding-path mismatch vs reference"

    # Case 4: sorting along a non-last axis (axis=1, num_units=2 -> group_size=4).
    y4 = jax.block_until_ready(group_sort_pallas(x, 2, axis=1))
    ref4 = jnp.sort(x.reshape(batch, 2, 4, hidden), axis=2).reshape(batch, seq, hidden)
    assert jnp.allclose(y4, ref4), "GroupSort axis=1 mismatch vs reference"
    assert _check_group_sorted(y4, 2, axis=1) == 1, "GroupSort failed."

    # Case 5: bf16 (packed-sublane dtype), group_size=8 unrolled path.
    xb = x.astype(jnp.bfloat16)
    yb = jax.block_until_ready(group_sort_pallas(xb, 4, axis=-1))
    refb = jnp.sort(xb.reshape(batch, seq, 4, 8), axis=-1).reshape(batch, seq, hidden)
    assert yb.dtype == jnp.bfloat16
    assert jnp.array_equal(yb, refb), "GroupSort bf16 mismatch vs reference"

    # Case 6: larger input exercising the multi-step grid and in-kernel chunk loop.
    x6 = jax.random.normal(jax.random.PRNGKey(2), (64, 4096), dtype=jnp.float32)
    y6 = jax.block_until_ready(group_sort_pallas(x6, 1024, axis=-1))
    ref6 = jnp.sort(x6.reshape(64, 1024, 4), axis=-1).reshape(64, 4096)
    assert jnp.allclose(y6, ref6), "GroupSort chunked-path mismatch vs reference"
    assert _check_group_sorted(y6, 1024, axis=-1) == 1, "GroupSort failed."

    print("KERNEL_OK")
</pallas_src>

<mosaic_0001>
module attributes {stable_mosaic.version = 11 : i64} {
  func.func @_group_sort_kernel(%arg0: i32, %arg1: memref<4x128xf32, #tpu.memory_space<vmem>>, %arg2: memref<4x128xf32, #tpu.memory_space<vmem>>) attributes {dimension_semantics = [#tpu.dimension_semantics<parallel>], iteration_bounds = array<i64: 1>, scalar_prefetch = 0 : i64, scratch_operands = 0 : i64, tpu.core_type = #tpu.core_type<tc>, window_params = [{transform_indices = @transform_0, window_bounds = array<i64: 4, 128>}, {transform_indices = @transform_1, window_bounds = array<i64: 4, 128>}]} {
    %0 = tpu.iota {dimensions = array<i32: 1>} : vector<1x128xi32>
    %c3_i32 = arith.constant 3 : i32
    %1 = vector.broadcast %c3_i32 : i32 to vector<1x128xi32>
    %2 = arith.andi %0, %1 : vector<1x128xi32>
    %c1_i32 = arith.constant 1 : i32
    %3 = vector.broadcast %c1_i32 : i32 to vector<1x128xi32>
    %4 = arith.andi %2, %3 : vector<1x128xi32>
    %c0_i32 = arith.constant 0 : i32
    %5 = vector.broadcast %c0_i32 : i32 to vector<1x128xi32>
    %6 = arith.cmpi eq, %4, %5 : vector<1x128xi32>
    %c3_i32_0 = arith.constant 3 : i32
    %7 = vector.broadcast %c3_i32_0 : i32 to vector<1x128xi32>
    %8 = arith.cmpi slt, %2, %7 : vector<1x128xi32>
    %9 = arith.andi %6, %8 : vector<1x128xi1>
    %10 = vector.shape_cast %9 : vector<1x128xi1> to vector<1x128xi1>
    %11 = vector.broadcast %10 : vector<1x128xi1> to vector<4x128xi1>
    %c1_i32_1 = arith.constant 1 : i32
    %12 = vector.broadcast %c1_i32_1 : i32 to vector<1x128xi32>
    %13 = arith.cmpi eq, %4, %12 : vector<1x128xi32>
    %c3_i32_2 = arith.constant 3 : i32
    %14 = vector.broadcast %c3_i32_2 : i32 to vector<1x128xi32>
    %15 = arith.cmpi slt, %2, %14 : vector<1x128xi32>
    %16 = arith.andi %13, %15 : vector<1x128xi1>
    %17 = vector.shape_cast %16 : vector<1x128xi1> to vector<1x128xi1>
    %18 = vector.broadcast %17 : vector<1x128xi1> to vector<4x128xi1>
    %c0_i32_3 = arith.constant 0 : i32
    %19 = vector.broadcast %c0_i32_3 : i32 to vector<1x128xi32>
    %20 = arith.cmpi eq, %4, %19 : vector<1x128xi32>
    %c1_i32_4 = arith.constant 1 : i32
    %21 = vector.broadcast %c1_i32_4 : i32 to vector<1x128xi32>
    %22 = arith.cmpi sge, %2, %21 : vector<1x128xi32>
    %23 = arith.andi %20, %22 : vector<1x128xi1>
    %24 = vector.shape_cast %23 : vector<1x128xi1> to vector<1x128xi1>
    %25 = vector.broadcast %24 : vector<1x128xi1> to vector<4x128xi1>
    %c0 = arith.constant 0 : index
    %c0_5 = arith.constant 0 : index
    %26 = vector.load %arg1[%c0, %c0_5] : memref<4x128xf32, #tpu.memory_space<vmem>>, vector<4x128xf32>
    %c127_i32 = arith.constant 127 : i32
    %27 = tpu.dynamic_rotate %26 by %c127_i32 dim 1 : vector<4x128xf32>, i32 -> vector<4x128xf32>
    %c1_i32_6 = arith.constant 1 : i32
    %28 = tpu.dynamic_rotate %26 by %c1_i32_6 dim 1 : vector<4x128xf32>, i32 -> vector<4x128xf32>
    %29 = arith.minimumf %26, %27 : vector<4x128xf32>
    %30 = arith.maximumf %26, %28 : vector<4x128xf32>
    %31 = arith.select %11, %29, %30 : vector<4x128xi1>, vector<4x128xf32>
    %c127_i32_7 = arith.constant 127 : i32
    %32 = tpu.dynamic_rotate %31 by %c127_i32_7 dim 1 : vector<4x128xf32>, i32 -> vector<4x128xf32>
    %c1_i32_8 = arith.constant 1 : i32
    %33 = tpu.dynamic_rotate %31 by %c1_i32_8 dim 1 : vector<4x128xf32>, i32 -> vector<4x128xf32>
    %34 = arith.minimumf %31, %32 : vector<4x128xf32>
    %35 = arith.maximumf %31, %33 : vector<4x128xf32>
    %36 = arith.select %25, %35, %31 : vector<4x128xi1>, vector<4x128xf32>
    %37 = arith.select %18, %34, %36 : vector<4x128xi1>, vector<4x128xf32>
    %c127_i32_9 = arith.constant 127 : i32
    %38 = tpu.dynamic_rotate %37 by %c127_i32_9 dim 1 : vector<4x128xf32>, i32 -> vector<4x128xf32>
    %c1_i32_10 = arith.constant 1 : i32
    %39 = tpu.dynamic_rotate %37 by %c1_i32_10 dim 1 : vector<4x128xf32>, i32 -> vector<4x128xf32>
    %40 = arith.minimumf %37, %38 : vector<4x128xf32>
    %41 = arith.maximumf %37, %39 : vector<4x128xf32>
    %42 = arith.select %11, %40, %41 : vector<4x128xi1>, vector<4x128xf32>
    %c127_i32_11 = arith.constant 127 : i32
    %43 = tpu.dynamic_rotate %42 by %c127_i32_11 dim 1 : vector<4x128xf32>, i32 -> vector<4x128xf32>
    %c1_i32_12 = arith.constant 1 : i32
    %44 = tpu.dynamic_rotate %42 by %c1_i32_12 dim 1 : vector<4x128xf32>, i32 -> vector<4x128xf32>
    %45 = arith.minimumf %42, %43 : vector<4x128xf32>
    %46 = arith.maximumf %42, %44 : vector<4x128xf32>
    %47 = arith.select %25, %46, %42 : vector<4x128xi1>, vector<4x128xf32>
    %48 = arith.select %18, %45, %47 : vector<4x128xi1>, vector<4x128xf32>
    %c0_13 = arith.constant 0 : index
    %c0_14 = arith.constant 0 : index
    %49 = vector.load %arg2[%c0_13, %c0_14] : memref<4x128xf32, #tpu.memory_space<vmem>>, vector<4x128xf32>
    tpu.vector_store %arg2[%c0_13, %c0_14], %48 {strides = array<i32>} : memref<4x128xf32, #tpu.memory_space<vmem>>, vector<4x128xf32>,
    return
  }
  func.func @transform_0(%arg0: i32) -> (i32, i32) {
    %c0_i32 = arith.constant 0 : i32
    %c0_i32_0 = arith.constant 0 : i32
    return %arg0, %c0_i32 : i32, i32
  }
  func.func @transform_1(%arg0: i32) -> (i32, i32) {
    %c0_i32 = arith.constant 0 : i32
    %c0_i32_0 = arith.constant 0 : i32
    return %arg0, %c0_i32 : i32, i32
  }
}

</mosaic_0001>

<llo_original>
// kernel: tpu_custom_call.1
$region0: #{tpu_custom_call.1}
  #allocation0 [shape = 'u32[]', space=smem, size = 0x4, offset = 0x4, fixed_abs, tag = 'smem constant byte address 0x4 - core index']
  #allocation1 [shape = 'u32[144,128]{1,0:T(1,128)}', space=vmem, size = 0x12000, scoped, tag = 'internal scratch']
  %s0 = inlined_call_operand.hbm [shape: f32[4,128], index: 0, kind: input, shape index: {}]
  %s1 = inlined_call_operand.hbm [shape: f32[4,128], index: 1, kind: output, shape index: {}]
  %s2 = sld [smem:[#allocation0]]
  $region18: #{tpu_custom_call.1} parent=0
    _
  %s4 = ssub.s32 1, %s2
  %s5 = scalar_select 0, %s4, %s2
  $region1: #{tpu_custom_call.1} parent=0
    #allocation2 [shape = 'u8[2048]{0}', space=vmem, size = 0x800, scoped, tag = 'input window, operand 0, single buffered']
    #allocation3 [shape = 's32[1]{0}', space=sflag, size = 0x4, scoped, tag = 'scoped memory for tpu_custom_call.1']
    #allocation4 [shape = 's32[1]{0}', space=sflag, size = 0x4, scoped, tag = 'scoped memory for tpu_custom_call.1']
    #allocation5 [shape = 'u8[2048]{0}', space=vmem, size = 0x800, scoped, tag = 'output window, operand 0, single buffered']
    %6 = vsyncpa [#allocation3], 0
    %7 = vsyncpa [#allocation4], 0
    // Predicated region
    $region2: #{tpu_custom_call.1} parent=1 // pred_check
      _
    $region3: #{tpu_custom_call.1} parent=1 // pred_check_branch
      %9 = sbr.rel (0) target = $region5
    $region4: #{tpu_custom_call.1} parent=1 // pred_region
      %s11 = ssub.s32 64, 64
      %12 = vsyncadd [#allocation3], %s11
      %s14 = sshll.u32 [#allocation2], 4
      %s15 = int_to_ptr.vmem [resolvable:$true] %s14
      %17 = dma.hbm_to_vmem [thread:$0]  %s0, 64, %s15, [#allocation3]
    $region5: #{tpu_custom_call.1} parent=1 // pred_fallthru
      _
    // Predicated region
    $region6: #{tpu_custom_call.1} parent=1 // pred_check
      _
    $region7: #{tpu_custom_call.1} parent=1 // pred_check_branch
      %19 = sbr.rel (0) target = $region9
    $region8: #{tpu_custom_call.1} parent=1 // pred_region
      %20 = dma.done [#allocation3], 64
    $region9: #{tpu_custom_call.1} parent=1 // pred_fallthru
      _
    %v21 = vlaneseq
    %v22 = vand.u32 %v21, 127
    %v23 = vand.u32 %v22, 3
    %v24 = vand.u32 %v23, 1
    %vm25 = vcmp.eq.s32.totalorder %v24, 0
    %vm26 = vcmp.lt.s32.totalorder %v23, 3
    %vm27 = vmand %vm25, %vm26
    %v28 = vsel %vm27, 1, 0
    %vm29 = vcmp.eq.s32.totalorder %v28, 1
    %vm30 = vcmp.eq.s32.totalorder %v24, 1
    %vm31 = vmand %vm30, %vm26
    %v32 = vsel %vm31, 1, 0
    %vm33 = vcmp.eq.s32.totalorder %v32, 1
    %vm34 = vcmp.ge.s32.totalorder %v23, 1
    %vm35 = vmand %vm25, %vm34
    %v36 = vsel %vm35, 1, 0
    %vm37 = vcmp.eq.s32.totalorder %v36, 1
    %v38 = vld [vmem:[#allocation2] sm:$0xf]
    %39 = vrot.lane.b32.xlu0 %v38, 127
    %v40 = vpop.permute.xlu0 %39
    %41 = vrot.lane.b32.xlu0 %v38, 1
    %v42 = vpop.permute.xlu0 %41
    %v43 = vmin.f32 %v38, %v40
    %v44 = vmax.f32 %v38, %v42
    %v45 = vsel %vm29, %v43, %v44
    %46 = vrot.lane.b32.xlu0 %v45, 127
    %v47 = vpop.permute.xlu0 %46
    %48 = vrot.lane.b32.xlu0 %v45, 1
    %v49 = vpop.permute.xlu0 %48
    %v50 = vmin.f32 %v45, %v47
    %v51 = vmax.f32 %v45, %v49
    %v52 = vsel %vm37, %v51, %v45
    %v53 = vsel %vm33, %v50, %v52
    %54 = vrot.lane.b32.xlu0 %v53, 127
    %v55 = vpop.permute.xlu0 %54
    %56 = vrot.lane.b32.xlu0 %v53, 1
    %v57 = vpop.permute.xlu0 %56
    %v58 = vmin.f32 %v53, %v55
    %v59 = vmax.f32 %v53, %v57
    %v60 = vsel %vm29, %v58, %v59
    %61 = vrot.lane.b32.xlu0 %v60, 127
    %v62 = vpop.permute.xlu0 %61
    %63 = vrot.lane.b32.xlu0 %v60, 1
    %v64 = vpop.permute.xlu0 %63
    %v65 = vmin.f32 %v60, %v62
    %v66 = vmax.f32 %v60, %v64
    %v67 = vsel %vm37, %v66, %v60
    %v68 = vsel %vm33, %v65, %v67
    %69 = vst [vmem:[#allocation5] sm:$0xf] %v68
    // Predicated region
    $region10: #{tpu_custom_call.1} parent=1 // pred_check
      _
    $region11: #{tpu_custom_call.1} parent=1 // pred_check_branch
      %71 = sbr.rel (0) target = $region13
    $region12: #{tpu_custom_call.1} parent=1 // pred_region
      %s73 = ssub.s32 64, 64
      %74 = vsyncadd [#allocation4], %s73
      %s76 = sshll.u32 [#allocation5], 4
      %s77 = int_to_ptr.vmem [resolvable:$true] %s76
      %79 = dma.vmem_to_hbm [thread:$0]  %s77, 64, %s1, [#allocation4]
    $region13: #{tpu_custom_call.1} parent=1 // pred_fallthru
      _
    // Predicated region
    $region14: #{tpu_custom_call.1} parent=1 // pred_check
      _
    $region15: #{tpu_custom_call.1} parent=1 // pred_check_branch
      %81 = sbr.rel (0) target = $region17
    $region16: #{tpu_custom_call.1} parent=1 // pred_region
      %82 = dma.done [#allocation4], 64
    $region17: #{tpu_custom_call.1} parent=1 // pred_fallthru
      _
    %83 = vsyncpa [#allocation3], 1
    %84 = vsyncpa [#allocation4], 1

</llo_original>
